<compile_context>
chip_gen: v5e
topology: v5e:2x2
jax: 0.10.0
libtpu: 0.0.40
codegen_flags: <defaults>
</compile_context>

<pallas_src>
import functools
import math

import jax
import jax.numpy as jnp
from jax import lax
from jax.experimental import pallas as pl
from jax.experimental.pallas import tpu as pltpu

_LANE = 128


def _round_up(x, m):
    return ((x + m - 1) // m) * m


def _sublane_granularity(dtype):
    """Sublane packing granularity: f32 -> 8, bf16 -> 16, int8/fp8 -> 32."""
    bits = jnp.dtype(dtype).itemsize * 8
    return max(8, 256 // bits)


def _pick_tile(dim, preferred, granularity):
    """Largest multiple of `granularity` dividing `dim`, <= preferred.
    `dim` is always a multiple of `granularity` here."""
    t = min(preferred, dim)
    t -= t % granularity
    while t > granularity:
        if dim % t == 0:
            return t
        t -= granularity
    return granularity


def _pick_head_group(num_heads, head_dim):
    """Heads processed per grid step; aims for ~128 lanes of head_dim work."""
    g = max(1, _LANE // max(head_dim, 1))
    g = min(g, num_heads)
    while num_heads % g:
        g -= 1
    return max(g, 1)


def _flash_attention_kernel(q_ref, k_ref, v_ref, *rest,
                            scale, has_mask, kv_len, kv_len_padded):
    if has_mask:
        mask_ref, o_ref, q_sc, m_sc, l_sc, acc_sc = rest
    else:
        o_ref, q_sc, m_sc, l_sc, acc_sc = rest
        mask_ref = None

    ki = pl.program_id(3)

    @pl.when(ki == 0)
    def _init():
        # 1/sqrt(D) folded into Q once per (b, head-group, q-tile), reused for
        # every KV tile (S*D multiplies instead of S*S, and not redone per ki).
        q_sc[...] = q_ref[...] * scale
        m_sc[...] = jnp.full_like(m_sc, -jnp.inf)
        l_sc[...] = jnp.zeros_like(l_sc)
        acc_sc[...] = jnp.zeros_like(acc_sc)

    # (G, tq, D) x (G, tkv, D) -> (G, tq, tkv); contract last dims (no explicit
    # K transpose), batch over the head group, f32 MXU accumulation.
    s = lax.dot_general(
        q_sc[...], k_ref[...],
        dimension_numbers=(((2,), (2,)), ((0,), (0,))),
        preferred_element_type=jnp.float32)

    if mask_ref is not None:
        m = mask_ref[...].astype(jnp.float32)
        if m.ndim == 2:            # head-broadcast mask tile
            m = m[None]
        s = s + m

    if kv_len != kv_len_padded:    # static: mask out padded key columns
        tkv = s.shape[-1]
        pos = ki * tkv + lax.broadcasted_iota(jnp.int32, (1, 1, tkv), 2)
        s = s + jnp.where(pos < kv_len, 0.0, -1e30).astype(jnp.float32)

    # Online (flash) softmax across KV tiles.
    m_prev = m_sc[...]
    m_new = jnp.maximum(m_prev, jnp.max(s, axis=-1, keepdims=True))
    alpha = jnp.exp(m_prev - m_new)

    x = s - m_new
    if v_ref.dtype == jnp.bfloat16:
        # bf16 EUP exp (v6e/v7x): probs land directly in V's dtype, no extra
        # (tq, tkv)-sized cast pass before the PV matmul.
        p = jnp.exp(x.astype(jnp.bfloat16))
        row_sum = jnp.sum(p, axis=-1, keepdims=True, dtype=jnp.float32)
    else:
        p = jnp.exp(x)
        row_sum = jnp.sum(p, axis=-1, keepdims=True)
        p = p.astype(v_ref.dtype)

    l_sc[...] = alpha * l_sc[...] + row_sum
    acc_sc[...] = alpha * acc_sc[...] + lax.dot_general(
        p, v_ref[...],
        dimension_numbers=(((2,), (1,)), ((0,), (0,))),
        preferred_element_type=jnp.float32)
    m_sc[...] = m_new

    # TODO(synk): dropout on attention_probs is identity (eval-mode semantics);
    # training-mode stochastic dropout is not implemented.

    @pl.when(ki == pl.num_programs(3) - 1)
    def _finalize():
        inv_l = pl.reciprocal(l_sc[...], approx=o_ref.dtype != jnp.float32)
        o_ref[...] = (acc_sc[...] * inv_l).astype(o_ref.dtype)


def base_attention_product(query_layer, key_layer, value_layer,
                           attention_mask=None, *,
                           q_tile=512, kv_tile=1024,
                           mask_stream_dtype=jnp.bfloat16):
    """Pallas implementation of BaseAttentionProduct.forward."""
    B, H, S, D = query_layer.shape
    scale = 1.0 / math.sqrt(D)
    dtype = query_layer.dtype

    G = _pick_head_group(H, D)                 # heads per grid step
    q_gran = _sublane_granularity(dtype)       # dtype-aware sublane granularity

    sq_pad = _round_up(S, q_gran)              # query rows: sublane granular
    skv_pad = _round_up(S, _LANE)              # key rows: lane granular

    # Keep ~q_tile query rows of work per step regardless of head grouping.
    tq = _pick_tile(sq_pad, max(q_gran, q_tile // G), q_gran)
    tkv = _pick_tile(skv_pad, kv_tile, _LANE)

    def pad_seq(x, target):
        pad = target - x.shape[2]
        if pad == 0:
            return x
        return jnp.pad(x, ((0, 0), (0, 0), (0, pad), (0, 0)))

    q = pad_seq(query_layer, sq_pad)
    k = pad_seq(key_layer, skv_pad)
    v = pad_seq(value_layer, skv_pad)

    grid = (B, H // G, sq_pad // tq, skv_pad // tkv)

    sqz = pl.Squeezed()
    q_spec = pl.BlockSpec((sqz, G, tq, D), lambda b, h, qi, ki: (b, h, qi, 0))
    kv_spec = pl.BlockSpec((sqz, G, tkv, D), lambda b, h, qi, ki: (b, h, ki, 0))
    out_spec = pl.BlockSpec((sqz, G, tq, D), lambda b, h, qi, ki: (b, h, qi, 0))

    in_specs = [q_spec, kv_spec, kv_spec]
    inputs = [q, k, v]

    has_mask = attention_mask is not None
    if has_mask:
        mask = attention_mask
        while mask.ndim < 4:       # left-pad dims, PyTorch broadcast semantics
            mask = mask[None]
        mb, mh, mq, mk = mask.shape
        assert mb in (1, B) and mh in (1, H) and mq in (1, S) and mk in (1, S), (
            "attention_mask must be broadcastable to [B, H, S, S]")
        # Stream the additive mask at reduced precision (halves the dominant
        # HBM bytes for dense masks); 0 / -1e9-style values survive bf16.
        # Pass mask_stream_dtype=None to keep the original dtype.
        if mask_stream_dtype is not None and jnp.issubdtype(mask.dtype, jnp.floating):
            mask = mask.astype(mask_stream_dtype)
        # Pad the non-broadcast q / key axes with zeros; padded key columns are
        # masked in-kernel, padded query rows are sliced off below.
        pad_q = sq_pad - mq if mq != 1 else 0
        pad_k = skv_pad - mk if mk != 1 else 0
        if pad_q or pad_k:
            mask = jnp.pad(mask, ((0, 0), (0, 0), (0, pad_q), (0, pad_k)))

        mq_blk = tq if mq != 1 else 1      # padding masks stream a single row
        mk_blk = tkv if mk != 1 else 1
        h_blk = sqz if mh == 1 else G      # head-broadcast masks: one tile / G heads

        def mask_index(b, h, qi, ki):
            return (b if mb != 1 else 0,
                    h if mh != 1 else 0,
                    qi if mq != 1 else 0,
                    ki if mk != 1 else 0)

        in_specs.append(pl.BlockSpec((sqz, h_blk, mq_blk, mk_blk), mask_index))
        inputs.append(mask)

    kernel = functools.partial(
        _flash_attention_kernel, scale=scale, has_mask=has_mask,
        kv_len=S, kv_len_padded=skv_pad)

    # TODO(synk): for D < 128 the output store is still only D lanes wide;
    # a fully lane-dense [.., G*D] output slab would need an extra wrapper-side
    # transpose of the result (head grouping already amortizes step overhead
    # and mask traffic).
    out = pl.pallas_call(
        kernel,
        out_shape=jax.ShapeDtypeStruct((B, H, sq_pad, D), dtype),
        grid_spec=pltpu.PrefetchScalarGridSpec(
            num_scalar_prefetch=0,
            grid=grid,
            in_specs=in_specs,
            out_specs=out_spec,
            scratch_shapes=[
                pltpu.VMEM((G, tq, D), dtype),        # pre-scaled Q tile
                pltpu.VMEM((G, tq, 1), jnp.float32),  # running max
                pltpu.VMEM((G, tq, 1), jnp.float32),  # running denominator
                pltpu.VMEM((G, tq, D), jnp.float32),  # f32 output accumulator
            ]),
        compiler_params=pltpu.CompilerParams(
            dimension_semantics=("parallel", "parallel", "parallel",
                                 "arbitrary"),
            # Explicit budget: comfortably above the working set at default
            # tiles, below v7x's 64 MiB physical VMEM.
            vmem_limit_bytes=48 * 1024 * 1024),
    )(*inputs)

    if sq_pad != S:
        out = out[:, :, :S, :]
    return out


def _reference(q, k, v, mask):
    d = q.shape[-1]
    s = jnp.einsum("bhqd,bhkd->bhqk",
                   q.astype(jnp.float32), k.astype(jnp.float32)) / math.sqrt(d)
    if mask is not None:
        s = s + mask.astype(jnp.float32)
    p = jax.nn.softmax(s, axis=-1)
    return jnp.einsum("bhqk,bhkd->bhqd", p, v.astype(jnp.float32))


if __name__ == "__main__":
    B, H, S, D = 2, 4, 8, 32
    key = jax.random.PRNGKey(0)
    kq, kk, kv, km = jax.random.split(key, 4)

    q = jax.random.normal(kq, (B, H, S, D), dtype=jnp.float32)
    k = jax.random.normal(kk, (B, H, S, D), dtype=jnp.float32)
    v = jax.random.normal(kv, (B, H, S, D), dtype=jnp.float32)

    # Dense additive mask [B, 1, S, S] (0 = visible, -1e9 = masked).
    mask_bits = jax.random.bernoulli(km, p=0.2, shape=(B, 1, S, S))
    dense_mask = jnp.where(mask_bits, -1e9, 0.0).astype(jnp.float32)

    out = jax.block_until_ready(base_attention_product(q, k, v, dense_mask))
    ref = _reference(q, k, v, dense_mask)
    assert out.shape == (B, H, S, D)
    assert jnp.allclose(out, ref, atol=5e-3, rtol=5e-3), "dense-mask mismatch"

    # No mask: no dense zeros tensor is allocated or DMA'd.
    out_nm = jax.block_until_ready(base_attention_product(q, k, v, None))
    ref_nm = _reference(q, k, v, None)
    assert jnp.allclose(out_nm, ref_nm, atol=5e-3, rtol=5e-3), "no-mask mismatch"

    # Padding-style mask [B, 1, 1, S]: streamed as one row, broadcast in-kernel.
    pad_bits = jax.random.bernoulli(km, p=0.3, shape=(B, 1, 1, S))
    pad_mask = jnp.where(pad_bits, -1e9, 0.0).astype(jnp.float32)
    out_pm = jax.block_until_ready(base_attention_product(q, k, v, pad_mask))
    ref_pm = _reference(q, k, v, pad_mask)
    assert jnp.allclose(out_pm, ref_pm, atol=5e-3, rtol=5e-3), "padding-mask mismatch"

    # bf16 inputs: exercises bf16 exp / bf16 prob matmul path.
    q16, k16, v16 = (x.astype(jnp.bfloat16) for x in (q, k, v))
    mask16 = dense_mask.astype(jnp.bfloat16)
    out_bf = jax.block_until_ready(base_attention_product(q16, k16, v16, mask16))
    ref_bf = _reference(q16, k16, v16, mask16)
    assert out_bf.dtype == jnp.bfloat16
    assert jnp.allclose(out_bf.astype(jnp.float32), ref_bf,
                        atol=5e-2, rtol=5e-2), "bf16 mismatch"

    print("KERNEL_OK")
</pallas_src>

<mosaic_0001>
module attributes {stable_mosaic.version = 11 : i64} {
  func.func @_flash_attention_kernel(%arg0: i32, %arg1: i32, %arg2: i32, %arg3: i32, %arg4: memref<1x4x8x32xf32, #tpu.memory_space<vmem>>, %arg5: memref<1x4x128x32xf32, #tpu.memory_space<vmem>>, %arg6: memref<1x4x128x32xf32, #tpu.memory_space<vmem>>, %arg7: memref<1x1x8x128xbf16, #tpu.memory_space<vmem>>, %arg8: memref<1x4x8x32xf32, #tpu.memory_space<vmem>>, %arg9: memref<4x8x32xf32, #tpu.memory_space<vmem>>, %arg10: memref<4x8x1xf32, #tpu.memory_space<vmem>>, %arg11: memref<4x8x1xf32, #tpu.memory_space<vmem>>, %arg12: memref<4x8x32xf32, #tpu.memory_space<vmem>>) attributes {dimension_semantics = [#tpu.dimension_semantics<parallel>, #tpu.dimension_semantics<parallel>, #tpu.dimension_semantics<parallel>, #tpu.dimension_semantics<arbitrary>], iteration_bounds = array<i64: 2, 1, 1, 1>, scalar_prefetch = 0 : i64, scratch_operands = 4 : i64, tpu.core_type = #tpu.core_type<tc>, window_params = [{transform_indices = @transform_0, window_bounds = array<i64: 1, 4, 8, 32>}, {transform_indices = @transform_1, window_bounds = array<i64: 1, 4, 128, 32>}, {transform_indices = @transform_2, window_bounds = array<i64: 1, 4, 128, 32>}, {transform_indices = @transform_3, window_bounds = array<i64: 1, 1, 8, 128>}, {transform_indices = @transform_4, window_bounds = array<i64: 1, 4, 8, 32>}]} {
    %c0_i32 = arith.constant 0 : i32
    %0 = arith.cmpi eq, %arg3, %c0_i32 : i32
    %1 = arith.extui %0 : i1 to i32
    %c0_i32_0 = arith.constant 0 : i32
    %2 = arith.cmpi ne, %1, %c0_i32_0 : i32
    scf.if %2 {
      %c0_40 = arith.constant 0 : index
      %c0_41 = arith.constant 0 : index
      %c0_42 = arith.constant 0 : index
      %c0_43 = arith.constant 0 : index
      %51 = vector.load %arg4[%c0_40, %c0_41, %c0_42, %c0_43] : memref<1x4x8x32xf32, #tpu.memory_space<vmem>>, vector<1x4x8x32xf32>
      %52 = vector.shape_cast %51 : vector<1x4x8x32xf32> to vector<4x8x32xf32>
      %cst_44 = arith.constant 0.176776692 : f32
      %53 = vector.broadcast %cst_44 : f32 to vector<4x8x32xf32>
      %54 = arith.mulf %52, %53 : vector<4x8x32xf32>
      %c0_45 = arith.constant 0 : index
      %c0_46 = arith.constant 0 : index
      %c0_47 = arith.constant 0 : index
      %55 = vector.load %arg9[%c0_45, %c0_46, %c0_47] : memref<4x8x32xf32, #tpu.memory_space<vmem>>, vector<4x8x32xf32>
      tpu.vector_store %arg9[%c0_45, %c0_46, %c0_47], %54 {strides = array<i32>} : memref<4x8x32xf32, #tpu.memory_space<vmem>>, vector<4x8x32xf32>,
      %cst_48 = arith.constant 0xFF800000 : f32
      %56 = vector.broadcast %cst_48 : f32 to vector<4x8x1xf32>
      %c0_49 = arith.constant 0 : index
      %c0_50 = arith.constant 0 : index
      %c0_51 = arith.constant 0 : index
      %57 = vector.load %arg10[%c0_49, %c0_50, %c0_51] : memref<4x8x1xf32, #tpu.memory_space<vmem>>, vector<4x8x1xf32>
      tpu.vector_store %arg10[%c0_49, %c0_50, %c0_51], %56 {strides = array<i32>} : memref<4x8x1xf32, #tpu.memory_space<vmem>>, vector<4x8x1xf32>,
      %cst_52 = arith.constant 0.000000e+00 : f32
      %58 = vector.broadcast %cst_52 : f32 to vector<4x8x1xf32>
      %c0_53 = arith.constant 0 : index
      %c0_54 = arith.constant 0 : index
      %c0_55 = arith.constant 0 : index
      %59 = vector.load %arg11[%c0_53, %c0_54, %c0_55] : memref<4x8x1xf32, #tpu.memory_space<vmem>>, vector<4x8x1xf32>
      tpu.vector_store %arg11[%c0_53, %c0_54, %c0_55], %58 {strides = array<i32>} : memref<4x8x1xf32, #tpu.memory_space<vmem>>, vector<4x8x1xf32>,
      %cst_56 = arith.constant 0.000000e+00 : f32
      %60 = vector.broadcast %cst_56 : f32 to vector<4x8x32xf32>
      %c0_57 = arith.constant 0 : index
      %c0_58 = arith.constant 0 : index
      %c0_59 = arith.constant 0 : index
      %61 = vector.load %arg12[%c0_57, %c0_58, %c0_59] : memref<4x8x32xf32, #tpu.memory_space<vmem>>, vector<4x8x32xf32>
      tpu.vector_store %arg12[%c0_57, %c0_58, %c0_59], %60 {strides = array<i32>} : memref<4x8x32xf32, #tpu.memory_space<vmem>>, vector<4x8x32xf32>,
    } else {
    }
    %c0 = arith.constant 0 : index
    %c0_1 = arith.constant 0 : index
    %c0_2 = arith.constant 0 : index
    %3 = vector.load %arg9[%c0, %c0_1, %c0_2] : memref<4x8x32xf32, #tpu.memory_space<vmem>>, vector<4x8x32xf32>
    %c0_3 = arith.constant 0 : index
    %c0_4 = arith.constant 0 : index
    %c0_5 = arith.constant 0 : index
    %c0_6 = arith.constant 0 : index
    %4 = vector.load %arg5[%c0_3, %c0_4, %c0_5, %c0_6] : memref<1x4x128x32xf32, #tpu.memory_space<vmem>>, vector<1x4x128x32xf32>
    %5 = vector.shape_cast %4 : vector<1x4x128x32xf32> to vector<4x128x32xf32>
    %cst = arith.constant dense<0.000000e+00> : vector<4x8x128xf32>
    %6 = tpu.matmul %3, %5, %cst {dimension_numbers = #tpu.dot_dimension_numbers<[2], [2], [1], [1], [0, 0, 0, 1, 1, 1], [0], [0]>} : vector<4x8x32xf32>, vector<4x128x32xf32>, vector<4x8x128xf32> -> vector<4x8x128xf32>
    %c0_7 = arith.constant 0 : index
    %c0_8 = arith.constant 0 : index
    %c0_9 = arith.constant 0 : index
    %c0_10 = arith.constant 0 : index
    %7 = vector.load %arg7[%c0_7, %c0_8, %c0_9, %c0_10] : memref<1x1x8x128xbf16, #tpu.memory_space<vmem>>, vector<1x1x8x128xbf16>
    %8 = vector.shape_cast %7 : vector<1x1x8x128xbf16> to vector<8x128xbf16>
    %9 = arith.extf %8 : vector<8x128xbf16> to vector<8x128xf32>
    %10 = vector.shape_cast %9 : vector<8x128xf32> to vector<1x8x128xf32>
    %11 = vector.broadcast %10 : vector<1x8x128xf32> to vector<4x8x128xf32>
    %12 = arith.addf %6, %11 : vector<4x8x128xf32>
    %c128_i32 = arith.constant 128 : i32
    %13 = arith.muli %arg3, %c128_i32 : i32
    %14 = tpu.iota {dimensions = array<i32: 2>} : vector<1x1x128xi32>
    %15 = vector.broadcast %13 : i32 to vector<1x1x128xi32>
    %16 = arith.addi %15, %14 : vector<1x1x128xi32>
    %c8_i32 = arith.constant 8 : i32
    %17 = vector.broadcast %c8_i32 : i32 to vector<1x1x128xi32>
    %18 = arith.cmpi slt, %16, %17 : vector<1x1x128xi32>
    %cst_11 = arith.constant 0.000000e+00 : f32
    %cst_12 = arith.constant -1.000000e+30 : f32
    %19 = vector.broadcast %cst_11 : f32 to vector<1x1x128xf32>
    %20 = vector.broadcast %cst_12 : f32 to vector<1x1x128xf32>
    %21 = arith.select %18, %19, %20 : vector<1x1x128xi1>, vector<1x1x128xf32>
    %22 = vector.broadcast %21 : vector<1x1x128xf32> to vector<4x8x128xf32>
    %23 = arith.addf %12, %22 : vector<4x8x128xf32>
    %c0_13 = arith.constant 0 : index
    %c0_14 = arith.constant 0 : index
    %c0_15 = arith.constant 0 : index
    %24 = vector.load %arg10[%c0_13, %c0_14, %c0_15] : memref<4x8x1xf32, #tpu.memory_space<vmem>>, vector<4x8x1xf32>
    %cst_16 = arith.constant dense<0xFF800000> : vector<4x8xf32>
    %25 = vector.multi_reduction <maximumf>, %23, %cst_16 [2] : vector<4x8x128xf32> to vector<4x8xf32>
    %26 = vector.shape_cast %25 : vector<4x8xf32> to vector<4x8x1xf32>
    %27 = arith.maximumf %24, %26 : vector<4x8x1xf32>
    %28 = arith.subf %24, %27 : vector<4x8x1xf32>
    %29 = math.exp %28 : vector<4x8x1xf32>
    %30 = vector.broadcast %27 : vector<4x8x1xf32> to vector<4x8x128xf32>
    %31 = arith.subf %23, %30 : vector<4x8x128xf32>
    %32 = math.exp %31 : vector<4x8x128xf32>
    %cst_17 = arith.constant dense<0.000000e+00> : vector<4x8xf32>
    %33 = vector.multi_reduction <add>, %32, %cst_17 [2] : vector<4x8x128xf32> to vector<4x8xf32>
    %34 = vector.shape_cast %33 : vector<4x8xf32> to vector<4x8x1xf32>
    %c0_18 = arith.constant 0 : index
    %c0_19 = arith.constant 0 : index
    %c0_20 = arith.constant 0 : index
    %35 = vector.load %arg11[%c0_18, %c0_19, %c0_20] : memref<4x8x1xf32, #tpu.memory_space<vmem>>, vector<4x8x1xf32>
    %36 = arith.mulf %29, %35 : vector<4x8x1xf32>
    %37 = arith.addf %36, %34 : vector<4x8x1xf32>
    %c0_21 = arith.constant 0 : index
    %c0_22 = arith.constant 0 : index
    %c0_23 = arith.constant 0 : index
    %38 = vector.load %arg11[%c0_21, %c0_22, %c0_23] : memref<4x8x1xf32, #tpu.memory_space<vmem>>, vector<4x8x1xf32>
    tpu.vector_store %arg11[%c0_21, %c0_22, %c0_23], %37 {strides = array<i32>} : memref<4x8x1xf32, #tpu.memory_space<vmem>>, vector<4x8x1xf32>,
    %c0_24 = arith.constant 0 : index
    %c0_25 = arith.constant 0 : index
    %c0_26 = arith.constant 0 : index
    %39 = vector.load %arg12[%c0_24, %c0_25, %c0_26] : memref<4x8x32xf32, #tpu.memory_space<vmem>>, vector<4x8x32xf32>
    %40 = vector.broadcast %29 : vector<4x8x1xf32> to vector<4x8x32xf32>
    %41 = arith.mulf %40, %39 : vector<4x8x32xf32>
    %c0_27 = arith.constant 0 : index
    %c0_28 = arith.constant 0 : index
    %c0_29 = arith.constant 0 : index
    %c0_30 = arith.constant 0 : index
    %42 = vector.load %arg6[%c0_27, %c0_28, %c0_29, %c0_30] : memref<1x4x128x32xf32, #tpu.memory_space<vmem>>, vector<1x4x128x32xf32>
    %43 = vector.shape_cast %42 : vector<1x4x128x32xf32> to vector<4x128x32xf32>
    %cst_31 = arith.constant dense<0.000000e+00> : vector<4x8x32xf32>
    %44 = tpu.matmul %32, %43, %cst_31 {dimension_numbers = #tpu.dot_dimension_numbers<[2], [1], [1], [2], [0, 0, 0, 1, 1, 2], [0], [0]>} : vector<4x8x128xf32>, vector<4x128x32xf32>, vector<4x8x32xf32> -> vector<4x8x32xf32>
    %45 = arith.addf %41, %44 : vector<4x8x32xf32>
    %c0_32 = arith.constant 0 : index
    %c0_33 = arith.constant 0 : index
    %c0_34 = arith.constant 0 : index
    %46 = vector.load %arg12[%c0_32, %c0_33, %c0_34] : memref<4x8x32xf32, #tpu.memory_space<vmem>>, vector<4x8x32xf32>
    tpu.vector_store %arg12[%c0_32, %c0_33, %c0_34], %45 {strides = array<i32>} : memref<4x8x32xf32, #tpu.memory_space<vmem>>, vector<4x8x32xf32>,
    %c0_35 = arith.constant 0 : index
    %c0_36 = arith.constant 0 : index
    %c0_37 = arith.constant 0 : index
    %47 = vector.load %arg10[%c0_35, %c0_36, %c0_37] : memref<4x8x1xf32, #tpu.memory_space<vmem>>, vector<4x8x1xf32>
    tpu.vector_store %arg10[%c0_35, %c0_36, %c0_37], %27 {strides = array<i32>} : memref<4x8x1xf32, #tpu.memory_space<vmem>>, vector<4x8x1xf32>,
    %c0_i32_38 = arith.constant 0 : i32
    %48 = arith.cmpi eq, %arg3, %c0_i32_38 : i32
    %49 = arith.extui %48 : i1 to i32
    %c0_i32_39 = arith.constant 0 : i32
    %50 = arith.cmpi ne, %49, %c0_i32_39 : i32
    scf.if %50 {
      %c0_40 = arith.constant 0 : index
      %c0_41 = arith.constant 0 : index
      %c0_42 = arith.constant 0 : index
      %51 = vector.load %arg11[%c0_40, %c0_41, %c0_42] : memref<4x8x1xf32, #tpu.memory_space<vmem>>, vector<4x8x1xf32>
      %52 = tpu.reciprocal %51 : vector<4x8x1xf32> -> vector<4x8x1xf32>
      %c0_43 = arith.constant 0 : index
      %c0_44 = arith.constant 0 : index
      %c0_45 = arith.constant 0 : index
      %53 = vector.load %arg12[%c0_43, %c0_44, %c0_45] : memref<4x8x32xf32, #tpu.memory_space<vmem>>, vector<4x8x32xf32>
      %54 = vector.broadcast %52 : vector<4x8x1xf32> to vector<4x8x32xf32>
      %55 = arith.mulf %53, %54 : vector<4x8x32xf32>
      %c0_46 = arith.constant 0 : index
      %c0_47 = arith.constant 0 : index
      %c0_48 = arith.constant 0 : index
      %c0_49 = arith.constant 0 : index
      %56 = vector.load %arg8[%c0_46, %c0_47, %c0_48, %c0_49] : memref<1x4x8x32xf32, #tpu.memory_space<vmem>>, vector<1x4x8x32xf32>
      %57 = vector.shape_cast %56 : vector<1x4x8x32xf32> to vector<4x8x32xf32>
      %58 = vector.shape_cast %55 : vector<4x8x32xf32> to vector<1x4x8x32xf32>
      tpu.vector_store %arg8[%c0_46, %c0_47, %c0_48, %c0_49], %58 {strides = array<i32>} : memref<1x4x8x32xf32, #tpu.memory_space<vmem>>, vector<1x4x8x32xf32>,
    } else {
    }
    return
  }
  func.func @transform_0(%arg0: i32, %arg1: i32, %arg2: i32, %arg3: i32) -> (i32, i32, i32, i32) {
    %c0_i32 = arith.constant 0 : i32
    %c0_i32_0 = arith.constant 0 : i32
    return %arg0, %arg1, %arg2, %c0_i32 : i32, i32, i32, i32
  }
  func.func @transform_1(%arg0: i32, %arg1: i32, %arg2: i32, %arg3: i32) -> (i32, i32, i32, i32) {
    %c0_i32 = arith.constant 0 : i32
    %c0_i32_0 = arith.constant 0 : i32
    return %arg0, %arg1, %arg3, %c0_i32 : i32, i32, i32, i32
  }
  func.func @transform_2(%arg0: i32, %arg1: i32, %arg2: i32, %arg3: i32) -> (i32, i32, i32, i32) {
    %c0_i32 = arith.constant 0 : i32
    %c0_i32_0 = arith.constant 0 : i32
    return %arg0, %arg1, %arg3, %c0_i32 : i32, i32, i32, i32
  }
  func.func @transform_3(%arg0: i32, %arg1: i32, %arg2: i32, %arg3: i32) -> (i32, i32, i32, i32) {
    %c0_i32 = arith.constant 0 : i32
    %c0_i32_0 = arith.constant 0 : i32
    return %arg0, %c0_i32, %arg2, %arg3 : i32, i32, i32, i32
  }
  func.func @transform_4(%arg0: i32, %arg1: i32, %arg2: i32, %arg3: i32) -> (i32, i32, i32, i32) {
    %c0_i32 = arith.constant 0 : i32
    %c0_i32_0 = arith.constant 0 : i32
    return %arg0, %arg1, %arg2, %c0_i32 : i32, i32, i32, i32
  }
}

</mosaic_0001>

<llo_original>
// kernel: tpu_custom_call.1
$region0: #{tpu_custom_call.1}
  #allocation0 [shape = 'u32[]', space=smem, size = 0x4, offset = 0x4, fixed_abs, tag = 'smem constant byte address 0x4 - core index']
  #allocation1 [shape = 'u32[72,128]{1,0:T(1,128)}', space=vmem, size = 0x9000, scoped, tag = 'internal scratch']
  #allocation2 [shape = 'f32[4,8,32]{2,1,0:T(8,128)}', space=vmem, size = 0x4000, scoped, tag = 'scratch operand']
  #allocation3 [shape = 'f32[4,8,1]{2,1,0:T(8,128)}', space=vmem, size = 0x4000, scoped, tag = 'scratch operand']
  #allocation4 [shape = 'f32[4,8,1]{2,1,0:T(8,128)}', space=vmem, size = 0x4000, scoped, tag = 'scratch operand']
  #allocation5 [shape = 'f32[4,8,32]{2,1,0:T(8,128)}', space=vmem, size = 0x4000, scoped, tag = 'scratch operand']
  %s0 = inlined_call_operand.vmem [shape: f32[2,4,8,32], index: 0, kind: input, shape index: {}]
  %s1 = inlined_call_operand.vmem [shape: f32[2,4,128,32], index: 1, kind: input, shape index: {}]
  %s2 = inlined_call_operand.vmem [shape: f32[2,4,128,32], index: 2, kind: input, shape index: {}]
  %s3 = inlined_call_operand.vmem [shape: bf16[2,1,8,128], index: 3, kind: input, shape index: {}]
  %s4 = inlined_call_operand.hbm [shape: f32[2,4,8,32], index: 4, kind: output, shape index: {}]
  %s5 = sld [smem:[#allocation0]]
  $region57: #{tpu_custom_call.1} parent=0
    _
  %s7 = ssub.s32 1, %s5
  %s8 = scalar_select 0, %s7, %s5
  $region1: #{tpu_custom_call.1} parent=0
    #allocation6 [shape = 'u8[32768]{0}', space=vmem, size = 0x8000, scoped, tag = 'output window, operand 0']
    #allocation7 [shape = 's32[2]{0}', space=sflag, size = 0x8, scoped, tag = 'scoped memory for tpu_custom_call.1']
    %9 = vsyncpa [#allocation7], 0
    %s10 = scalar_lea.sflag [#allocation7], 1
    %11 = vsyncpa %s10, 0
    loop: start=0, step=1, limit=4
    $region2: #{tpu_custom_call.1} parent=1 // loop_pre_header
      _
    $region3: #{tpu_custom_call.1} parent=1 // loop_header
      %s13 = sphi 0, %s17
      %p14 = scmp.ge.s32.totalorder %s13, 4
      %s20 = sphi 0, %s46
      %s21 = sphi 0, %s42
      %s22 = sphi 0, %s38
      %s23 = sphi 0, %s34
      %s24 = sphi 0, %s20
      %s25 = sphi 0, %s21
      %s26 = sphi 0, %s22
      %s27 = sphi 0, %s23
      %s28 = sphi 0, %s24
      %s29 = sphi 0, %s25
      %s30 = sphi 0, %s26
      %s31 = sphi 0, %s27
      %s53 = sphi 0, %s55
      %s56 = sphi 0, %s53
      %s57 = sphi 0, %s56
      %s73 = sphi 0, %s57
      %s83 = sphi 0, %s85
      %s86 = sphi 0, %s83
      %s87 = sphi 0, %s86
      %s103 = sphi 0, %s87
      %s113 = sphi 0, %s115
      %s116 = sphi 0, %s113
      %s117 = sphi 0, %s116
      %s133 = sphi 0, %s117
      %s143 = sphi 0, %s145
      %s146 = sphi 0, %s143
      %s147 = sphi 0, %s146
      %s163 = sphi 0, %s147
      %s173 = sphi 0, %s175
      %s176 = sphi 0, %s173
      %s177 = sphi 0, %s176
      %s193 = sphi 0, %s177
    $region4: #{tpu_custom_call.1} parent=1 // loop_header_branch
      %16 = sbr.rel (%p14) target = $region8
    $region5: #{tpu_custom_call.1} parent=1 // loop_body
      %s18 = ssub.s32 %s13, 1
      %s19 = ssub.s32 %s13, 2
      %s32 = sadd.s32 1, %s23
      %p33 = scmp.ge.s32.totalorder %s32, 1
      %s34 = scalar_select %p33, 0, %s32
      %s35 = sadd.s32 1, %s22
      %s36 = scalar_select %p33, %s35, %s22
      %p37 = scmp.ge.s32.totalorder %s36, 1
      %s38 = scalar_select %p37, 0, %s36
      %s39 = sadd.s32 1, %s21
      %s40 = scalar_select %p37, %s39, %s21
      %p41 = scmp.ge.s32.totalorder %s40, 1
      %s42 = scalar_select %p41, 0, %s40
      %s43 = sadd.s32 1, %s20
      %s44 = scalar_select %p41, %s43, %s20
      %p45 = scmp.ge.s32.totalorder %s44, 2
      %s46 = scalar_select %p45, 0, %s44
      %s47 = ssub.s32 %s20, %s46
      %s48 = ssub.s32 %s21, %s42
      %s49 = sor.u32 %s47, %s48
      %s50 = ssub.s32 %s22, %s38
      %s51 = sor.u32 %s49, %s50
      %p52 = scmp.eq.s32.totalorder %s51, 0
      %s54 = sadd.s32 %s53, 1
      %s55 = scalar_select %p52, %s53, %s54
      %p58 = pneg %p52
      %p59 = scmp.eq.s32.totalorder %s13, 1
      %p60 = por %p58, %p59
      %p61 = scmp.ne.s32.totalorder %s53, %s56
      %p62 = scmp.eq.s32.totalorder %s13, 0
      %p63 = por %p61, %p62
      %p64 = scmp.ne.s32.totalorder %s53, %s56
      %p65 = scmp.eq.s32.totalorder %s18, 1
      %p66 = por %p64, %p65
      %p67 = scmp.ne.s32.totalorder %s56, %s57
      %p68 = scmp.eq.s32.totalorder %s18, 0
      %p69 = por %p67, %p68
      %p70 = scmp.ne.s32.totalorder %s56, %s57
      %p71 = scmp.eq.s32.totalorder %s19, 1
      %p72 = por %p70, %p71
      %p74 = scmp.ne.s32.totalorder %s57, %s73
      %p75 = scmp.eq.s32.totalorder %s19, 0
      %p76 = por %p74, %p75
      %s77 = ssub.s32 %s20, %s46
      %s78 = ssub.s32 %s21, %s42
      %s79 = sor.u32 %s77, %s78
      %s80 = ssub.s32 %s23, %s34
      %s81 = sor.u32 %s79, %s80
      %p82 = scmp.eq.s32.totalorder %s81, 0
      %s84 = sadd.s32 %s83, 1
      %s85 = scalar_select %p82, %s83, %s84
      %p88 = pneg %p82
      %p89 = scmp.eq.s32.totalorder %s13, 1
      %p90 = por %p88, %p89
      %p91 = scmp.ne.s32.totalorder %s83, %s86
      %p92 = scmp.eq.s32.totalorder %s13, 0
      %p93 = por %p91, %p92
      %p94 = scmp.ne.s32.totalorder %s83, %s86
      %p95 = scmp.eq.s32.totalorder %s18, 1
      %p96 = por %p94, %p95
      %p97 = scmp.ne.s32.totalorder %s86, %s87
      %p98 = scmp.eq.s32.totalorder %s18, 0
      %p99 = por %p97, %p98
      %p100 = scmp.ne.s32.totalorder %s86, %s87
      %p101 = scmp.eq.s32.totalorder %s19, 1
      %p102 = por %p100, %p101
      %p104 = scmp.ne.s32.totalorder %s87, %s103
      %p105 = scmp.eq.s32.totalorder %s19, 0
      %p106 = por %p104, %p105
      %s107 = ssub.s32 %s20, %s46
      %s108 = ssub.s32 %s21, %s42
      %s109 = sor.u32 %s107, %s108
      %s110 = ssub.s32 %s23, %s34
      %s111 = sor.u32 %s109, %s110
      %p112 = scmp.eq.s32.totalorder %s111, 0
      %s114 = sadd.s32 %s113, 1
      %s115 = scalar_select %p112, %s113, %s114
      %p118 = pneg %p112
      %p119 = scmp.eq.s32.totalorder %s13, 1
      %p120 = por %p118, %p119
      %p121 = scmp.ne.s32.totalorder %s113, %s116
      %p122 = scmp.eq.s32.totalorder %s13, 0
      %p123 = por %p121, %p122
      %p124 = scmp.ne.s32.totalorder %s113, %s116
      %p125 = scmp.eq.s32.totalorder %s18, 1
      %p126 = por %p124, %p125
      %p127 = scmp.ne.s32.totalorder %s116, %s117
      %p128 = scmp.eq.s32.totalorder %s18, 0
      %p129 = por %p127, %p128
      %p130 = scmp.ne.s32.totalorder %s116, %s117
      %p131 = scmp.eq.s32.totalorder %s19, 1
      %p132 = por %p130, %p131
      %p134 = scmp.ne.s32.totalorder %s117, %s133
      %p135 = scmp.eq.s32.totalorder %s19, 0
      %p136 = por %p134, %p135
      %s137 = ssub.s32 %s20, %s46
      %s138 = ssub.s32 %s22, %s38
      %s139 = sor.u32 %s137, %s138
      %s140 = ssub.s32 %s23, %s34
      %s141 = sor.u32 %s139, %s140
      %p142 = scmp.eq.s32.totalorder %s141, 0
      %s144 = sadd.s32 %s143, 1
      %s145 = scalar_select %p142, %s143, %s144
      %p148 = pneg %p142
      %p149 = scmp.eq.s32.totalorder %s13, 1
      %p150 = por %p148, %p149
      %p151 = scmp.ne.s32.totalorder %s143, %s146
      %p152 = scmp.eq.s32.totalorder %s13, 0
      %p153 = por %p151, %p152
      %p154 = scmp.ne.s32.totalorder %s143, %s146
      %p155 = scmp.eq.s32.totalorder %s18, 1
      %p156 = por %p154, %p155
      %p157 = scmp.ne.s32.totalorder %s146, %s147
      %p158 = scmp.eq.s32.totalorder %s18, 0
      %p159 = por %p157, %p158
      %p160 = scmp.ne.s32.totalorder %s146, %s147
      %p161 = scmp.eq.s32.totalorder %s19, 1
      %p162 = por %p160, %p161
      %p164 = scmp.ne.s32.totalorder %s147, %s163
      %p165 = scmp.eq.s32.totalorder %s19, 0
      %p166 = por %p164, %p165
      %s167 = ssub.s32 %s20, %s46
      %s168 = ssub.s32 %s21, %s42
      %s169 = sor.u32 %s167, %s168
      %s170 = ssub.s32 %s22, %s38
      %s171 = sor.u32 %s169, %s170
      %p172 = scmp.eq.s32.totalorder %s171, 0
      %s174 = sadd.s32 %s173, 1
      %s175 = scalar_select %p172, %s173, %s174
      %p178 = pneg %p172
      %p179 = scmp.eq.s32.totalorder %s13, 1
      %p180 = por %p178, %p179
      %p181 = scmp.ne.s32.totalorder %s173, %s176
      %p182 = scmp.eq.s32.totalorder %s13, 0
      %p183 = por %p181, %p182
      %p184 = scmp.ne.s32.totalorder %s173, %s176
      %p185 = scmp.eq.s32.totalorder %s18, 1
      %p186 = por %p184, %p185
      %p187 = scmp.ne.s32.totalorder %s176, %s177
      %p188 = scmp.eq.s32.totalorder %s18, 0
      %p189 = por %p187, %p188
      %p190 = scmp.ne.s32.totalorder %s176, %s177
      %p191 = scmp.eq.s32.totalorder %s19, 1
      %p192 = por %p190, %p191
      %p194 = scmp.ne.s32.totalorder %s177, %s193
      %p195 = scmp.eq.s32.totalorder %s19, 0
      %p196 = por %p194, %p195
      %p197 = scmp.le.s32.totalorder 1, %s13
      %p198 = scmp.lt.s32.totalorder %s13, 3
      %p199 = pnand %p197, %p198
      %p200 = pneg %p199
      // Predicated region
      $region9: #{tpu_custom_call.1} parent=5 // pred_check
        _
      $region10: #{tpu_custom_call.1} parent=5 // pred_check_branch
        %202 = sbr.rel (%p199) target = $region12
      $region11: #{tpu_custom_call.1} parent=5 // pred_region
        %s203 = ssub.s32 %s13, 1
      $region12: #{tpu_custom_call.1} parent=5 // pred_fallthru
        _
      %p204 = scmp.lt.s32.totalorder %s13, 2
      // Predicated region
      $region13: #{tpu_custom_call.1} parent=5 // pred_check
        %p205 = pneg %p204
      $region14: #{tpu_custom_call.1} parent=5 // pred_check_branch
        %207 = sbr.rel (%p205) target = $region16
      $region15: #{tpu_custom_call.1} parent=5 // pred_region
        // Predicated region
        $region17: #{tpu_custom_call.1} parent=15 // pred_check
          %p208 = pneg %p63
        $region18: #{tpu_custom_call.1} parent=15 // pred_check_branch
          %210 = sbr.rel (%p208) target = $region20
        $region19: #{tpu_custom_call.1} parent=15 // pred_region
          %s211 = smul.u32 4, %s21
          %p212 = scmp.lt.s32.totalorder %s20, 1
          %s213 = scalar_select %p212, %s20, 1
          %p214 = scmp.lt.s32.totalorder %s211, 3
          %s215 = scalar_select %p214, %s211, 3
          %p216 = scmp.lt.s32.totalorder %s22, 0
          %s217 = scalar_select %p216, %s22, 0
          %s218 = sadd.s32 %s217, %s215
          %s219 = smul.addr %s213, 4
          %s220 = sadd.s32 %s218, %s219
          %s221 = smul.addr %s220, 8
          %s222 = scalar_lea.vmem %s0, %s221
          %s223 = smul.u32 4, %s21
        $region20: #{tpu_custom_call.1} parent=15 // pred_fallthru
          _
        // Predicated region
        $region21: #{tpu_custom_call.1} parent=15 // pred_check
          %p224 = pneg %p93
        $region22: #{tpu_custom_call.1} parent=15 // pred_check_branch
          %226 = sbr.rel (%p224) target = $region24
        $region23: #{tpu_custom_call.1} parent=15 // pred_region
          %s227 = smul.u32 4, %s21
          %s228 = smul.u32 16, %s23
          %p229 = scmp.lt.s32.totalorder %s20, 1
          %s230 = scalar_select %p229, %s20, 1
          %p231 = scmp.lt.s32.totalorder %s227, 3
          %s232 = scalar_select %p231, %s227, 3
          %p233 = scmp.lt.s32.totalorder %s228, 15
          %s234 = scalar_select %p233, %s228, 15
          %s235 = smul.addr %s232, 16
          %s236 = sadd.s32 %s234, %s235
          %s237 = smul.addr %s230, 64
          %s238 = sadd.s32 %s236, %s237
          %s239 = smul.addr %s238, 8
          %s240 = scalar_lea.vmem %s1, %s239
          %s241 = smul.u32 4, %s21
          %s242 = smul.u32 16, %s23
        $region24: #{tpu_custom_call.1} parent=15 // pred_fallthru
          _
        // Predicated region
        $region25: #{tpu_custom_call.1} parent=15 // pred_check
          %p243 = pneg %p123
        $region26: #{tpu_custom_call.1} parent=15 // pred_check_branch
          %245 = sbr.rel (%p243) target = $region28
        $region27: #{tpu_custom_call.1} parent=15 // pred_region
          %s246 = smul.u32 4, %s21
          %s247 = smul.u32 16, %s23
          %p248 = scmp.lt.s32.totalorder %s20, 1
          %s249 = scalar_select %p248, %s20, 1
          %p250 = scmp.lt.s32.totalorder %s246, 3
          %s251 = scalar_select %p250, %s246, 3
          %p252 = scmp.lt.s32.totalorder %s247, 15
          %s253 = scalar_select %p252, %s247, 15
          %s254 = smul.addr %s251, 16
          %s255 = sadd.s32 %s253, %s254
          %s256 = smul.addr %s249, 64
          %s257 = sadd.s32 %s255, %s256
          %s258 = smul.addr %s257, 8
          %s259 = scalar_lea.vmem %s2, %s258
          %s260 = smul.u32 4, %s21
          %s261 = smul.u32 16, %s23
        $region28: #{tpu_custom_call.1} parent=15 // pred_fallthru
          _
        // Predicated region
        $region29: #{tpu_custom_call.1} parent=15 // pred_check
          %p262 = pneg %p153
        $region30: #{tpu_custom_call.1} parent=15 // pred_check_branch
          %264 = sbr.rel (%p262) target = $region32
        $region31: #{tpu_custom_call.1} parent=15 // pred_region
          %p265 = scmp.lt.s32.totalorder %s20, 1
          %s266 = scalar_select %p265, %s20, 1
          %p267 = scmp.lt.s32.totalorder %s22, 0
          %s268 = scalar_select %p267, %s22, 0
          %p269 = scmp.lt.s32.totalorder %s23, 0
          %s270 = scalar_select %p269, %s23, 0
          %s271 = sadd.s32 %s270, %s268
          %s272 = sadd.s32 %s271, %s266
          %s273 = smul.addr %s272, 4
          %s274 = scalar_lea.vmem %s3, %s273
        $region32: #{tpu_custom_call.1} parent=15 // pred_fallthru
          _
      $region16: #{tpu_custom_call.1} parent=5 // pred_fallthru
        _
      %p275 = scmp.le.s32.totalorder 1, %s13
      %p276 = scmp.lt.s32.totalorder %s13, 3
      %p277 = pnand %p275, %p276
      %p278 = pneg %p277
      // Predicated region
      $region33: #{tpu_custom_call.1} parent=5 // pred_check
        _
      $region34: #{tpu_custom_call.1} parent=5 // pred_check_branch
        %280 = sbr.rel (%p277) target = $region36
      $region35: #{tpu_custom_call.1} parent=5 // pred_region
        %s281 = ssub.s32 %s13, 1
        %s282 = smul.u32 4, %s25
        %p283 = scmp.lt.s32.totalorder %s24, 1
        %s284 = scalar_select %p283, %s24, 1
        %p285 = scmp.lt.s32.totalorder %s282, 3
        %s286 = scalar_select %p285, %s282, 3
        %p287 = scmp.lt.s32.totalorder %s26, 0
        %s288 = scalar_select %p287, %s26, 0
        %s289 = sadd.s32 %s288, %s286
        %s290 = smul.addr %s284, 4
        %s291 = sadd.s32 %s289, %s290
        %s292 = smul.addr %s291, 8
        %s293 = scalar_lea.vmem %s0, %s292
        %p294 = pneg %p69
        %p295 = pneg %p66
        %s296 = smul.u32 4, %s25
        %s297 = smul.u32 16, %s27
        %p298 = scmp.lt.s32.totalorder %s24, 1
        %s299 = scalar_select %p298, %s24, 1
        %p300 = scmp.lt.s32.totalorder %s296, 3
        %s301 = scalar_select %p300, %s296, 3
        %p302 = scmp.lt.s32.totalorder %s297, 15
        %s303 = scalar_select %p302, %s297, 15
        %s304 = smul.addr %s301, 16
        %s305 = sadd.s32 %s303, %s304
        %s306 = smul.addr %s299, 64
        %s307 = sadd.s32 %s305, %s306
        %s308 = smul.addr %s307, 8
        %s309 = scalar_lea.vmem %s1, %s308
        %p310 = pneg %p99
        %p311 = pneg %p96
        %s312 = smul.u32 4, %s25
        %s313 = smul.u32 16, %s27
        %p314 = scmp.lt.s32.totalorder %s24, 1
        %s315 = scalar_select %p314, %s24, 1
        %p316 = scmp.lt.s32.totalorder %s312, 3
        %s317 = scalar_select %p316, %s312, 3
        %p318 = scmp.lt.s32.totalorder %s313, 15
        %s319 = scalar_select %p318, %s313, 15
        %s320 = smul.addr %s317, 16
        %s321 = sadd.s32 %s319, %s320
        %s322 = smul.addr %s315, 64
        %s323 = sadd.s32 %s321, %s322
        %s324 = smul.addr %s323, 8
        %s325 = scalar_lea.vmem %s2, %s324
        %p326 = pneg %p129
        %p327 = pneg %p126
        %p328 = scmp.lt.s32.totalorder %s24, 1
        %s329 = scalar_select %p328, %s24, 1
        %p330 = scmp.lt.s32.totalorder %s26, 0
        %s331 = scalar_select %p330, %s26, 0
        %p332 = scmp.lt.s32.totalorder %s27, 0
        %s333 = scalar_select %p332, %s27, 0
        %s334 = sadd.s32 %s333, %s331
        %s335 = sadd.s32 %s334, %s329
        %s336 = smul.addr %s335, 4
        %s337 = scalar_lea.vmem %s3, %s336
        %p338 = pneg %p159
        %p339 = pneg %p156
        %p340 = pneg %p189
        %p341 = pneg %p186
        %s342 = sand.u32 %s176, 1
        %s343 = scalar_lea.sflag [#allocation7], %s342
        %s344 = sand.u32 %s176, 1
        %s345 = smul.addr %s344, 32
        %s346 = scalar_lea.vmem [#allocation6], %s345
        %s347 = smul.u32 4, %s25
        %p348 = scmp.lt.s32.totalorder %s24, 1
        %s349 = scalar_select %p348, %s24, 1
        %p350 = scmp.lt.s32.totalorder %s347, 3
        %s351 = scalar_select %p350, %s347, 3
        %p352 = scmp.lt.s32.totalorder %s26, 0
        %s353 = scalar_select %p352, %s26, 0
        %s354 = sadd.s32 %s353, %s351
        %s355 = smul.addr %s349, 4
        %s356 = sadd.s32 %s354, %s355
        %s357 = smul.addr %s356, 8
        %s358 = scalar_lea.vmem %s0, %s357
        %s359 = smul.u32 4, %s25
        %s360 = smul.u32 4, %s25
        %s361 = smul.u32 16, %s27
        %p362 = scmp.lt.s32.totalorder %s24, 1
        %s363 = scalar_select %p362, %s24, 1
        %p364 = scmp.lt.s32.totalorder %s360, 3
        %s365 = scalar_select %p364, %s360, 3
        %p366 = scmp.lt.s32.totalorder %s361, 15
        %s367 = scalar_select %p366, %s361, 15
        %s368 = smul.addr %s365, 16
        %s369 = sadd.s32 %s367, %s368
        %s370 = smul.addr %s363, 64
        %s371 = sadd.s32 %s369, %s370
        %s372 = smul.addr %s371, 8
        %s373 = scalar_lea.vmem %s1, %s372
        %s374 = smul.u32 4, %s25
        %s375 = smul.u32 16, %s27
        %s376 = smul.u32 4, %s25
        %s377 = smul.u32 16, %s27
        %p378 = scmp.lt.s32.totalorder %s24, 1
        %s379 = scalar_select %p378, %s24, 1
        %p380 = scmp.lt.s32.totalorder %s376, 3
        %s381 = scalar_select %p380, %s376, 3
        %p382 = scmp.lt.s32.totalorder %s377, 15
        %s383 = scalar_select %p382, %s377, 15
        %s384 = smul.addr %s381, 16
        %s385 = sadd.s32 %s383, %s384
        %s386 = smul.addr %s379, 64
        %s387 = sadd.s32 %s385, %s386
        %s388 = smul.addr %s387, 8
        %s389 = scalar_lea.vmem %s2, %s388
        %s390 = smul.u32 4, %s25
        %s391 = smul.u32 16, %s27
        %p392 = scmp.lt.s32.totalorder %s24, 1
        %s393 = scalar_select %p392, %s24, 1
        %p394 = scmp.lt.s32.totalorder %s26, 0
        %s395 = scalar_select %p394, %s26, 0
        %p396 = scmp.lt.s32.totalorder %s27, 0
        %s397 = scalar_select %p396, %s27, 0
        %s398 = sadd.s32 %s397, %s395
        %s399 = sadd.s32 %s398, %s393
        %s400 = smul.addr %s399, 4
        %s401 = scalar_lea.vmem %s3, %s400
        %s402 = smul.u32 4, %s25
        %p403 = scmp.eq.s32.totalorder %s27, 0
        // Predicated region
        $region37: #{tpu_custom_call.1} parent=35 // pred_check
          %p404 = pneg %p403
        $region38: #{tpu_custom_call.1} parent=35 // pred_check_branch
          %406 = sbr.rel (%p404) target = $region40
        $region39: #{tpu_custom_call.1} parent=35 // pred_region
          %v407 = vld [vmem:[%s358] sm:$0xff]
          %v408 = vld [vmem:[%s358 + $0x8] sm:$0xff]
          %v409 = vld [vmem:[%s358 + $0x10] sm:$0xff]
          %v410 = vld [vmem:[%s358 + $0x18] sm:$0xff]
          %v411 = vmul.f32 %v407, 0.17677669
          %v412 = vmul.f32 %v408, 0.17677669
          %v413 = vmul.f32 %v409, 0.17677669
          %v414 = vmul.f32 %v410, 0.17677669
          %vm415 = vcmask 261120
          %416 = vst.msk [vmem:[#allocation2] sm:$0xff] %vm415, %v411
          %417 = vst.msk [vmem:[#allocation2 + $0x8] sm:$0xff] %vm415, %v412
          %418 = vst.msk [vmem:[#allocation2 + $0x10] sm:$0xff] %vm415, %v413
          %419 = vst.msk [vmem:[#allocation2 + $0x18] sm:$0xff] %vm415, %v414
          %vm420 = vcmask 7168
          %421 = vst.msk [vmem:[#allocation3] sm:$0xff] %vm420, -inf
          %422 = vst.msk [vmem:[#allocation3 + $0x8] sm:$0xff] %vm420, -inf
          %423 = vst.msk [vmem:[#allocation3 + $0x10] sm:$0xff] %vm420, -inf
          %424 = vst.msk [vmem:[#allocation3 + $0x18] sm:$0xff] %vm420, -inf
          %425 = vst.msk [vmem:[#allocation4] sm:$0xff] %vm420, 0.0
          %426 = vst.msk [vmem:[#allocation4 + $0x8] sm:$0xff] %vm420, 0.0
          %427 = vst.msk [vmem:[#allocation4 + $0x10] sm:$0xff] %vm420, 0.0
          %428 = vst.msk [vmem:[#allocation4 + $0x18] sm:$0xff] %vm420, 0.0
          %429 = vst.msk [vmem:[#allocation5] sm:$0xff] %vm415, 0.0
          %430 = vst.msk [vmem:[#allocation5 + $0x8] sm:$0xff] %vm415, 0.0
          %431 = vst.msk [vmem:[#allocation5 + $0x10] sm:$0xff] %vm415, 0.0
          %432 = vst.msk [vmem:[#allocation5 + $0x18] sm:$0xff] %vm415, 0.0
        $region40: #{tpu_custom_call.1} parent=35 // pred_fallthru
          _
        %v433 = vld [vmem:[#allocation2] sm:$0xff]
        %v434 = vld [vmem:[#allocation2 + $0x8] sm:$0xff]
        %v435 = vld [vmem:[#allocation2 + $0x10] sm:$0xff]
        %v436 = vld [vmem:[#allocation2 + $0x18] sm:$0xff]
        %v437 = vld [vmem:[%s373] sm:$0xff]
        %v438 = vld [vmem:[%s373 + $0x8] sm:$0xff]
        %v439 = vld [vmem:[%s373 + $0x10] sm:$0xff]
        %v440 = vld [vmem:[%s373 + $0x18] sm:$0xff]
        %v441 = vld [vmem:[%s373 + $0x20] sm:$0xff]
        %v442 = vld [vmem:[%s373 + $0x28] sm:$0xff]
        %v443 = vld [vmem:[%s373 + $0x30] sm:$0xff]
        %v444 = vld [vmem:[%s373 + $0x38] sm:$0xff]
        %v445 = vld [vmem:[%s373 + $0x40] sm:$0xff]
        %v446 = vld [vmem:[%s373 + $0x48] sm:$0xff]
        %v447 = vld [vmem:[%s373 + $0x50] sm:$0xff]
        %v448 = vld [vmem:[%s373 + $0x58] sm:$0xff]
        %v449 = vld [vmem:[%s373 + $0x60] sm:$0xff]
        %v450 = vld [vmem:[%s373 + $0x68] sm:$0xff]
        %v451 = vld [vmem:[%s373 + $0x70] sm:$0xff]
        %v452 = vld [vmem:[%s373 + $0x78] sm:$0xff]
        %v453 = vld [vmem:[%s373 + $0x80] sm:$0xff]
        %v454 = vld [vmem:[%s373 + $0x88] sm:$0xff]
        %v455 = vld [vmem:[%s373 + $0x90] sm:$0xff]
        %v456 = vld [vmem:[%s373 + $0x98] sm:$0xff]
        %v457 = vld [vmem:[%s373 + $0xa0] sm:$0xff]
        %v458 = vld [vmem:[%s373 + $0xa8] sm:$0xff]
        %v459 = vld [vmem:[%s373 + $0xb0] sm:$0xff]
        %v460 = vld [vmem:[%s373 + $0xb8] sm:$0xff]
        %v461 = vld [vmem:[%s373 + $0xc0] sm:$0xff]
        %v462 = vld [vmem:[%s373 + $0xc8] sm:$0xff]
        %v463 = vld [vmem:[%s373 + $0xd0] sm:$0xff]
        %v464 = vld [vmem:[%s373 + $0xd8] sm:$0xff]
        %v465 = vld [vmem:[%s373 + $0xe0] sm:$0xff]
        %v466 = vld [vmem:[%s373 + $0xe8] sm:$0xff]
        %v467 = vld [vmem:[%s373 + $0xf0] sm:$0xff]
        %v468 = vld [vmem:[%s373 + $0xf8] sm:$0xff]
        %v469 = vld [vmem:[%s373 + $0x100] sm:$0xff]
        %v470 = vld [vmem:[%s373 + $0x108] sm:$0xff]
        %v471 = vld [vmem:[%s373 + $0x110] sm:$0xff]
        %v472 = vld [vmem:[%s373 + $0x118] sm:$0xff]
        %v473 = vld [vmem:[%s373 + $0x120] sm:$0xff]
        %v474 = vld [vmem:[%s373 + $0x128] sm:$0xff]
        %v475 = vld [vmem:[%s373 + $0x130] sm:$0xff]
        %v476 = vld [vmem:[%s373 + $0x138] sm:$0xff]
        %v477 = vld [vmem:[%s373 + $0x140] sm:$0xff]
        %v478 = vld [vmem:[%s373 + $0x148] sm:$0xff]
        %v479 = vld [vmem:[%s373 + $0x150] sm:$0xff]
        %v480 = vld [vmem:[%s373 + $0x158] sm:$0xff]
        %v481 = vld [vmem:[%s373 + $0x160] sm:$0xff]
        %v482 = vld [vmem:[%s373 + $0x168] sm:$0xff]
        %v483 = vld [vmem:[%s373 + $0x170] sm:$0xff]
        %v484 = vld [vmem:[%s373 + $0x178] sm:$0xff]
        %v485 = vld [vmem:[%s373 + $0x180] sm:$0xff]
        %v486 = vld [vmem:[%s373 + $0x188] sm:$0xff]
        %v487 = vld [vmem:[%s373 + $0x190] sm:$0xff]
        %v488 = vld [vmem:[%s373 + $0x198] sm:$0xff]
        %v489 = vld [vmem:[%s373 + $0x1a0] sm:$0xff]
        %v490 = vld [vmem:[%s373 + $0x1a8] sm:$0xff]
        %v491 = vld [vmem:[%s373 + $0x1b0] sm:$0xff]
        %v492 = vld [vmem:[%s373 + $0x1b8] sm:$0xff]
        %v493 = vld [vmem:[%s373 + $0x1c0] sm:$0xff]
        %v494 = vld [vmem:[%s373 + $0x1c8] sm:$0xff]
        %v495 = vld [vmem:[%s373 + $0x1d0] sm:$0xff]
        %v496 = vld [vmem:[%s373 + $0x1d8] sm:$0xff]
        %v497 = vld [vmem:[%s373 + $0x1e0] sm:$0xff]
        %v498 = vld [vmem:[%s373 + $0x1e8] sm:$0xff]
        %v499 = vld [vmem:[%s373 + $0x1f0] sm:$0xff]
        %v500 = vld [vmem:[%s373 + $0x1f8] sm:$0xff]
        %v501 = vld [vmem:[%s401] sm:$0xf]
        %v502 = vunpack.c.l.bf16 %v501
        %vm503 = vcmask 261120
        %v505 = vsel %vm503, %v433, 0
        %v508 = vsel %vm503, %v437, 0
        %v511 = vsel %vm503, %v438, 0
        %v514 = vsel %vm503, %v439, 0
        %v517 = vsel %vm503, %v440, 0
        %v520 = vsel %vm503, %v441, 0
        %v523 = vsel %vm503, %v442, 0
        %v526 = vsel %vm503, %v443, 0
        %v529 = vsel %vm503, %v444, 0
        %v532 = vsel %vm503, %v445, 0
        %v535 = vsel %vm503, %v446, 0
        %v538 = vsel %vm503, %v447, 0
        %v541 = vsel %vm503, %v448, 0
        %v544 = vsel %vm503, %v449, 0
        %v547 = vsel %vm503, %v450, 0
        %v550 = vsel %vm503, %v451, 0
        %v553 = vsel %vm503, %v452, 0
        %555 = vmatpush.xpose.msra.mxu0 %v553
        %556 = vmatpush.xpose.msra.mxu0 %v550
        %557 = vmatpush.xpose.msra.mxu0 %v547
        %558 = vmatpush.xpose.msra.mxu0 %v544
        %559 = vmatpush.xpose.msra.mxu0 %v541
        %560 = vmatpush.xpose.msra.mxu0 %v538
        %561 = vmatpush.xpose.msra.mxu0 %v535
        %562 = vmatpush.xpose.msra.mxu0 %v532
        %563 = vmatpush.xpose.msra.mxu0 %v529
        %564 = vmatpush.xpose.msra.mxu0 %v526
        %565 = vmatpush.xpose.msra.mxu0 %v523
        %566 = vmatpush.xpose.msra.mxu0 %v520
        %567 = vmatpush.xpose.msra.mxu0 %v517
        %568 = vmatpush.xpose.msra.mxu0 %v514
        %569 = vmatpush.xpose.msra.mxu0 %v511
        %570 = vmatpush.xpose.msra.mxu0 %v508
        %571 = vmatmul.f32.gmra.mxu0 %v505
        %v572 = vpop.f32.mrf.mxu0
        %v573 = vadd.f32 %v502, %v572
        %574 = vdwg.mxu0
        %v576 = vsel %vm503, %v434, 0
        %v579 = vsel %vm503, %v453, 0
        %v582 = vsel %vm503, %v454, 0
        %v585 = vsel %vm503, %v455, 0
        %v588 = vsel %vm503, %v456, 0
        %v591 = vsel %vm503, %v457, 0
        %v594 = vsel %vm503, %v458, 0
        %v597 = vsel %vm503, %v459, 0
        %v600 = vsel %vm503, %v460, 0
        %v603 = vsel %vm503, %v461, 0
        %v606 = vsel %vm503, %v462, 0
        %v609 = vsel %vm503, %v463, 0
        %v612 = vsel %vm503, %v464, 0
        %v615 = vsel %vm503, %v465, 0
        %v618 = vsel %vm503, %v466, 0
        %v621 = vsel %vm503, %v467, 0
        %v624 = vsel %vm503, %v468, 0
        %626 = vmatpush.xpose.msra.mxu0 %v624
        %627 = vmatpush.xpose.msra.mxu0 %v621
        %628 = vmatpush.xpose.msra.mxu0 %v618
        %629 = vmatpush.xpose.msra.mxu0 %v615
        %630 = vmatpush.xpose.msra.mxu0 %v612
        %631 = vmatpush.xpose.msra.mxu0 %v609
        %632 = vmatpush.xpose.msra.mxu0 %v606
        %633 = vmatpush.xpose.msra.mxu0 %v603
        %634 = vmatpush.xpose.msra.mxu0 %v600
        %635 = vmatpush.xpose.msra.mxu0 %v597
        %636 = vmatpush.xpose.msra.mxu0 %v594
        %637 = vmatpush.xpose.msra.mxu0 %v591
        %638 = vmatpush.xpose.msra.mxu0 %v588
        %639 = vmatpush.xpose.msra.mxu0 %v585
        %640 = vmatpush.xpose.msra.mxu0 %v582
        %641 = vmatpush.xpose.msra.mxu0 %v579
        %642 = vmatmul.f32.gmra.mxu0 %v576
        %v643 = vpop.f32.mrf.mxu0
        %v644 = vadd.f32 %v502, %v643
        %645 = vdwg.mxu0
        %v647 = vsel %vm503, %v435, 0
        %v650 = vsel %vm503, %v469, 0
        %v653 = vsel %vm503, %v470, 0
        %v656 = vsel %vm503, %v471, 0
        %v659 = vsel %vm503, %v472, 0
        %v662 = vsel %vm503, %v473, 0
        %v665 = vsel %vm503, %v474, 0
        %v668 = vsel %vm503, %v475, 0
        %v671 = vsel %vm503, %v476, 0
        %v674 = vsel %vm503, %v477, 0
        %v677 = vsel %vm503, %v478, 0
        %v680 = vsel %vm503, %v479, 0
        %v683 = vsel %vm503, %v480, 0
        %v686 = vsel %vm503, %v481, 0
        %v689 = vsel %vm503, %v482, 0
        %v692 = vsel %vm503, %v483, 0
        %v695 = vsel %vm503, %v484, 0
        %697 = vmatpush.xpose.msra.mxu0 %v695
        %698 = vmatpush.xpose.msra.mxu0 %v692
        %699 = vmatpush.xpose.msra.mxu0 %v689
        %700 = vmatpush.xpose.msra.mxu0 %v686
        %701 = vmatpush.xpose.msra.mxu0 %v683
        %702 = vmatpush.xpose.msra.mxu0 %v680
        %703 = vmatpush.xpose.msra.mxu0 %v677
        %704 = vmatpush.xpose.msra.mxu0 %v674
        %705 = vmatpush.xpose.msra.mxu0 %v671
        %706 = vmatpush.xpose.msra.mxu0 %v668
        %707 = vmatpush.xpose.msra.mxu0 %v665
        %708 = vmatpush.xpose.msra.mxu0 %v662
        %709 = vmatpush.xpose.msra.mxu0 %v659
        %710 = vmatpush.xpose.msra.mxu0 %v656
        %711 = vmatpush.xpose.msra.mxu0 %v653
        %712 = vmatpush.xpose.msra.mxu0 %v650
        %713 = vmatmul.f32.gmra.mxu0 %v647
        %v714 = vpop.f32.mrf.mxu0
        %v715 = vadd.f32 %v502, %v714
        %716 = vdwg.mxu0
        %v718 = vsel %vm503, %v436, 0
        %v721 = vsel %vm503, %v485, 0
        %v724 = vsel %vm503, %v486, 0
        %v727 = vsel %vm503, %v487, 0
        %v730 = vsel %vm503, %v488, 0
        %v733 = vsel %vm503, %v489, 0
        %v736 = vsel %vm503, %v490, 0
        %v739 = vsel %vm503, %v491, 0
        %v742 = vsel %vm503, %v492, 0
        %v745 = vsel %vm503, %v493, 0
        %v748 = vsel %vm503, %v494, 0
        %v751 = vsel %vm503, %v495, 0
        %v754 = vsel %vm503, %v496, 0
        %v757 = vsel %vm503, %v497, 0
        %v760 = vsel %vm503, %v498, 0
        %v763 = vsel %vm503, %v499, 0
        %v766 = vsel %vm503, %v500, 0
        %768 = vmatpush.xpose.msra.mxu0 %v766
        %769 = vmatpush.xpose.msra.mxu0 %v763
        %770 = vmatpush.xpose.msra.mxu0 %v760
        %771 = vmatpush.xpose.msra.mxu0 %v757
        %772 = vmatpush.xpose.msra.mxu0 %v754
        %773 = vmatpush.xpose.msra.mxu0 %v751
        %774 = vmatpush.xpose.msra.mxu0 %v748
        %775 = vmatpush.xpose.msra.mxu0 %v745
        %776 = vmatpush.xpose.msra.mxu0 %v742
        %777 = vmatpush.xpose.msra.mxu0 %v739
        %778 = vmatpush.xpose.msra.mxu0 %v736
        %779 = vmatpush.xpose.msra.mxu0 %v733
        %780 = vmatpush.xpose.msra.mxu0 %v730
        %781 = vmatpush.xpose.msra.mxu0 %v727
        %782 = vmatpush.xpose.msra.mxu0 %v724
        %783 = vmatpush.xpose.msra.mxu0 %v721
        %784 = vmatmul.f32.gmra.mxu0 %v718
        %v785 = vpop.f32.mrf.mxu0
        %v786 = vadd.f32 %v502, %v785
        %787 = vdwg.mxu0
        %s788 = smul.u32 %s27, 128
        %v789 = vlaneseq
        %v790 = vand.u32 %v789, 127
        %v791 = vstv %s788
        %v792 = vadd.s32 %v791, %v790
        %vm793 = vcmp.lt.s32.totalorder %v792, 8
        %v794 = vsel %vm793, 0.0, -1e+30
        %v795 = vadd.f32 %v573, %v794
        %v796 = vadd.f32 %v644, %v794
        %v797 = vadd.f32 %v715, %v794
        %v798 = vadd.f32 %v786, %v794
        %v799 = vld [vmem:[#allocation3] sm:$0xff]
        %v800 = vld [vmem:[#allocation3 + $0x8] sm:$0xff]
        %v801 = vld [vmem:[#allocation3 + $0x10] sm:$0xff]
        %v802 = vld [vmem:[#allocation3 + $0x18] sm:$0xff]
        %803 = vmax.xlane.f32.xlu0 %v795
        %v804 = vpop.xlane.xlu0 %803
        %805 = vmax.xlane.f32.xlu0 %v796
        %v806 = vpop.xlane.xlu0 %805
        %807 = vmax.xlane.f32.xlu0 %v797
        %v808 = vpop.xlane.xlu0 %807
        %809 = vmax.xlane.f32.xlu0 %v798
        %v810 = vpop.xlane.xlu0 %809
        %v811 = vmax.f32 %v799, %v804
        %v812 = vmax.f32 %v800, %v806
        %v813 = vmax.f32 %v801, %v808
        %v814 = vmax.f32 %v802, %v810
        %v815 = vsub.f32 %v799, %v811
        %v816 = vsub.f32 %v800, %v812
        %v817 = vsub.f32 %v801, %v813
        %v818 = vsub.f32 %v802, %v814
        %v819 = vmul.f32 %v815, 1.442695
        %v820 = vpow.pop %v819
        %v821 = vmul.f32 %v816, 1.442695
        %v822 = vpow.pop %v821
        %v823 = vmul.f32 %v817, 1.442695
        %v824 = vpow.pop %v823
        %v825 = vmul.f32 %v818, 1.442695
        %v826 = vpow.pop %v825
        %828 = vset.pattern.permute.xlu0 0
        %829 = vperm.xlu0 %828, %v811
        %v830 = vpop.permute.xlu0 %829
        %833 = vset.pattern.permute.xlu0 0
        %834 = vperm.xlu0 %833, %v812
        %v835 = vpop.permute.xlu0 %834
        %838 = vset.pattern.permute.xlu0 0
        %839 = vperm.xlu0 %838, %v813
        %v840 = vpop.permute.xlu0 %839
        %843 = vset.pattern.permute.xlu0 0
        %844 = vperm.xlu0 %843, %v814
        %v845 = vpop.permute.xlu0 %844
        %v847 = vsub.f32 %v795, %v830
        %v848 = vsub.f32 %v796, %v835
        %v849 = vsub.f32 %v797, %v840
        %v850 = vsub.f32 %v798, %v845
        %v851 = vmul.f32 %v847, 1.442695
        %v852 = vpow.pop %v851
        %v853 = vmul.f32 %v848, 1.442695
        %v854 = vpow.pop %v853
        %v855 = vmul.f32 %v849, 1.442695
        %v856 = vpow.pop %v855
        %v857 = vmul.f32 %v850, 1.442695
        %v858 = vpow.pop %v857
        %859 = vadd.xlane.f32.xlu0 %v852
        %v860 = vpop.xlane.xlu0 %859
        %861 = vadd.xlane.f32.xlu0 %v854
        %v862 = vpop.xlane.xlu0 %861
        %863 = vadd.xlane.f32.xlu0 %v856
        %v864 = vpop.xlane.xlu0 %863
        %865 = vadd.xlane.f32.xlu0 %v858
        %v866 = vpop.xlane.xlu0 %865
        %v867 = vld [vmem:[#allocation4] sm:$0xff]
        %v868 = vld [vmem:[#allocation4 + $0x8] sm:$0xff]
        %v869 = vld [vmem:[#allocation4 + $0x10] sm:$0xff]
        %v870 = vld [vmem:[#allocation4 + $0x18] sm:$0xff]
        %v871 = vmul.f32 %v820, %v867
        %v872 = vmul.f32 %v822, %v868
        %v873 = vmul.f32 %v824, %v869
        %v874 = vmul.f32 %v826, %v870
        %v875 = vadd.f32 %v871, %v860
        %v876 = vadd.f32 %v872, %v862
        %v877 = vadd.f32 %v873, %v864
        %v878 = vadd.f32 %v874, %v866
        %vm879 = vcmask 7168
        %880 = vst.msk [vmem:[#allocation4] sm:$0xff] %vm879, %v875
        %881 = vst.msk [vmem:[#allocation4 + $0x8] sm:$0xff] %vm879, %v876
        %882 = vst.msk [vmem:[#allocation4 + $0x10] sm:$0xff] %vm879, %v877
        %883 = vst.msk [vmem:[#allocation4 + $0x18] sm:$0xff] %vm879, %v878
        %v884 = vld [vmem:[#allocation5] sm:$0xff]
        %v885 = vld [vmem:[#allocation5 + $0x8] sm:$0xff]
        %v886 = vld [vmem:[#allocation5 + $0x10] sm:$0xff]
        %v887 = vld [vmem:[#allocation5 + $0x18] sm:$0xff]
        %889 = vset.pattern.permute.xlu0 0
        %890 = vperm.xlu0 %889, %v820
        %v891 = vpop.permute.xlu0 %890
        %894 = vset.pattern.permute.xlu0 0
        %895 = vperm.xlu0 %894, %v822
        %v896 = vpop.permute.xlu0 %895
        %899 = vset.pattern.permute.xlu0 0
        %900 = vperm.xlu0 %899, %v824
        %v901 = vpop.permute.xlu0 %900
        %904 = vset.pattern.permute.xlu0 0
        %905 = vperm.xlu0 %904, %v826
        %v906 = vpop.permute.xlu0 %905
        %v908 = vmul.f32 %v891, %v884
        %v909 = vmul.f32 %v896, %v885
        %v910 = vmul.f32 %v901, %v886
        %v911 = vmul.f32 %v906, %v887
        %v912 = vld [vmem:[%s389] sm:$0xff]
        %v913 = vld [vmem:[%s389 + $0x8] sm:$0xff]
        %v914 = vld [vmem:[%s389 + $0x10] sm:$0xff]
        %v915 = vld [vmem:[%s389 + $0x18] sm:$0xff]
        %v916 = vld [vmem:[%s389 + $0x20] sm:$0xff]
        %v917 = vld [vmem:[%s389 + $0x28] sm:$0xff]
        %v918 = vld [vmem:[%s389 + $0x30] sm:$0xff]
        %v919 = vld [vmem:[%s389 + $0x38] sm:$0xff]
        %v920 = vld [vmem:[%s389 + $0x40] sm:$0xff]
        %v921 = vld [vmem:[%s389 + $0x48] sm:$0xff]
        %v922 = vld [vmem:[%s389 + $0x50] sm:$0xff]
        %v923 = vld [vmem:[%s389 + $0x58] sm:$0xff]
        %v924 = vld [vmem:[%s389 + $0x60] sm:$0xff]
        %v925 = vld [vmem:[%s389 + $0x68] sm:$0xff]
        %v926 = vld [vmem:[%s389 + $0x70] sm:$0xff]
        %v927 = vld [vmem:[%s389 + $0x78] sm:$0xff]
        %v928 = vld [vmem:[%s389 + $0x80] sm:$0xff]
        %v929 = vld [vmem:[%s389 + $0x88] sm:$0xff]
        %v930 = vld [vmem:[%s389 + $0x90] sm:$0xff]
        %v931 = vld [vmem:[%s389 + $0x98] sm:$0xff]
        %v932 = vld [vmem:[%s389 + $0xa0] sm:$0xff]
        %v933 = vld [vmem:[%s389 + $0xa8] sm:$0xff]
        %v934 = vld [vmem:[%s389 + $0xb0] sm:$0xff]
        %v935 = vld [vmem:[%s389 + $0xb8] sm:$0xff]
        %v936 = vld [vmem:[%s389 + $0xc0] sm:$0xff]
        %v937 = vld [vmem:[%s389 + $0xc8] sm:$0xff]
        %v938 = vld [vmem:[%s389 + $0xd0] sm:$0xff]
        %v939 = vld [vmem:[%s389 + $0xd8] sm:$0xff]
        %v940 = vld [vmem:[%s389 + $0xe0] sm:$0xff]
        %v941 = vld [vmem:[%s389 + $0xe8] sm:$0xff]
        %v942 = vld [vmem:[%s389 + $0xf0] sm:$0xff]
        %v943 = vld [vmem:[%s389 + $0xf8] sm:$0xff]
        %v944 = vld [vmem:[%s389 + $0x100] sm:$0xff]
        %v945 = vld [vmem:[%s389 + $0x108] sm:$0xff]
        %v946 = vld [vmem:[%s389 + $0x110] sm:$0xff]
        %v947 = vld [vmem:[%s389 + $0x118] sm:$0xff]
        %v948 = vld [vmem:[%s389 + $0x120] sm:$0xff]
        %v949 = vld [vmem:[%s389 + $0x128] sm:$0xff]
        %v950 = vld [vmem:[%s389 + $0x130] sm:$0xff]
        %v951 = vld [vmem:[%s389 + $0x138] sm:$0xff]
        %v952 = vld [vmem:[%s389 + $0x140] sm:$0xff]
        %v953 = vld [vmem:[%s389 + $0x148] sm:$0xff]
        %v954 = vld [vmem:[%s389 + $0x150] sm:$0xff]
        %v955 = vld [vmem:[%s389 + $0x158] sm:$0xff]
        %v956 = vld [vmem:[%s389 + $0x160] sm:$0xff]
        %v957 = vld [vmem:[%s389 + $0x168] sm:$0xff]
        %v958 = vld [vmem:[%s389 + $0x170] sm:$0xff]
        %v959 = vld [vmem:[%s389 + $0x178] sm:$0xff]
        %v960 = vld [vmem:[%s389 + $0x180] sm:$0xff]
        %v961 = vld [vmem:[%s389 + $0x188] sm:$0xff]
        %v962 = vld [vmem:[%s389 + $0x190] sm:$0xff]
        %v963 = vld [vmem:[%s389 + $0x198] sm:$0xff]
        %v964 = vld [vmem:[%s389 + $0x1a0] sm:$0xff]
        %v965 = vld [vmem:[%s389 + $0x1a8] sm:$0xff]
        %v966 = vld [vmem:[%s389 + $0x1b0] sm:$0xff]
        %v967 = vld [vmem:[%s389 + $0x1b8] sm:$0xff]
        %v968 = vld [vmem:[%s389 + $0x1c0] sm:$0xff]
        %v969 = vld [vmem:[%s389 + $0x1c8] sm:$0xff]
        %v970 = vld [vmem:[%s389 + $0x1d0] sm:$0xff]
        %v971 = vld [vmem:[%s389 + $0x1d8] sm:$0xff]
        %v972 = vld [vmem:[%s389 + $0x1e0] sm:$0xff]
        %v973 = vld [vmem:[%s389 + $0x1e8] sm:$0xff]
        %v974 = vld [vmem:[%s389 + $0x1f0] sm:$0xff]
        %v975 = vld [vmem:[%s389 + $0x1f8] sm:$0xff]
        %976 = vmatpush.msra.mxu0 %v927
        %977 = vmatpush.msra.mxu0 %v926
        %978 = vmatpush.msra.mxu0 %v925
        %979 = vmatpush.msra.mxu0 %v924
        %980 = vmatpush.msra.mxu0 %v923
        %981 = vmatpush.msra.mxu0 %v922
        %982 = vmatpush.msra.mxu0 %v921
        %983 = vmatpush.msra.mxu0 %v920
        %984 = vmatpush.msra.mxu0 %v919
        %985 = vmatpush.msra.mxu0 %v918
        %986 = vmatpush.msra.mxu0 %v917
        %987 = vmatpush.msra.mxu0 %v916
        %988 = vmatpush.msra.mxu0 %v915
        %989 = vmatpush.msra.mxu0 %v914
        %990 = vmatpush.msra.mxu0 %v913
        %991 = vmatpush.msra.mxu0 %v912
        %992 = vmatmul.f32.gmra.mxu0 %v852
        %v993 = vpop.f32.mrf.mxu0
        %v994 = vadd.f32 0.0, %v993
        %995 = vdwg.mxu0
        %996 = vmatpush.msra.mxu0 %v943
        %997 = vmatpush.msra.mxu0 %v942
        %998 = vmatpush.msra.mxu0 %v941
        %999 = vmatpush.msra.mxu0 %v940
        %1000 = vmatpush.msra.mxu0 %v939
        %1001 = vmatpush.msra.mxu0 %v938
        %1002 = vmatpush.msra.mxu0 %v937
        %1003 = vmatpush.msra.mxu0 %v936
        %1004 = vmatpush.msra.mxu0 %v935
        %1005 = vmatpush.msra.mxu0 %v934
        %1006 = vmatpush.msra.mxu0 %v933
        %1007 = vmatpush.msra.mxu0 %v932
        %1008 = vmatpush.msra.mxu0 %v931
        %1009 = vmatpush.msra.mxu0 %v930
        %1010 = vmatpush.msra.mxu0 %v929
        %1011 = vmatpush.msra.mxu0 %v928
        %1012 = vmatmul.f32.gmra.mxu0 %v854
        %v1013 = vpop.f32.mrf.mxu0
        %v1014 = vadd.f32 0.0, %v1013
        %1015 = vdwg.mxu0
        %1016 = vmatpush.msra.mxu0 %v959
        %1017 = vmatpush.msra.mxu0 %v958
        %1018 = vmatpush.msra.mxu0 %v957
        %1019 = vmatpush.msra.mxu0 %v956
        %1020 = vmatpush.msra.mxu0 %v955
        %1021 = vmatpush.msra.mxu0 %v954
        %1022 = vmatpush.msra.mxu0 %v953
        %1023 = vmatpush.msra.mxu0 %v952
        %1024 = vmatpush.msra.mxu0 %v951
        %1025 = vmatpush.msra.mxu0 %v950
        %1026 = vmatpush.msra.mxu0 %v949
        %1027 = vmatpush.msra.mxu0 %v948
        %1028 = vmatpush.msra.mxu0 %v947
        %1029 = vmatpush.msra.mxu0 %v946
        %1030 = vmatpush.msra.mxu0 %v945
        %1031 = vmatpush.msra.mxu0 %v944
        %1032 = vmatmul.f32.gmra.mxu0 %v856
        %v1033 = vpop.f32.mrf.mxu0
        %v1034 = vadd.f32 0.0, %v1033
        %1035 = vdwg.mxu0
        %1036 = vmatpush.msra.mxu0 %v975
        %1037 = vmatpush.msra.mxu0 %v974
        %1038 = vmatpush.msra.mxu0 %v973
        %1039 = vmatpush.msra.mxu0 %v972
        %1040 = vmatpush.msra.mxu0 %v971
        %1041 = vmatpush.msra.mxu0 %v970
        %1042 = vmatpush.msra.mxu0 %v969
        %1043 = vmatpush.msra.mxu0 %v968
        %1044 = vmatpush.msra.mxu0 %v967
        %1045 = vmatpush.msra.mxu0 %v966
        %1046 = vmatpush.msra.mxu0 %v965
        %1047 = vmatpush.msra.mxu0 %v964
        %1048 = vmatpush.msra.mxu0 %v963
        %1049 = vmatpush.msra.mxu0 %v962
        %1050 = vmatpush.msra.mxu0 %v961
        %1051 = vmatpush.msra.mxu0 %v960
        %1052 = vmatmul.f32.gmra.mxu0 %v858
        %v1053 = vpop.f32.mrf.mxu0
        %v1054 = vadd.f32 0.0, %v1053
        %1055 = vdwg.mxu0
        %v1056 = vadd.f32 %v908, %v994
        %v1057 = vadd.f32 %v909, %v1014
        %v1058 = vadd.f32 %v910, %v1034
        %v1059 = vadd.f32 %v911, %v1054
        %1060 = vst.msk [vmem:[#allocation5] sm:$0xff] %vm503, %v1056
        %1061 = vst.msk [vmem:[#allocation5 + $0x8] sm:$0xff] %vm503, %v1057
        %1062 = vst.msk [vmem:[#allocation5 + $0x10] sm:$0xff] %vm503, %v1058
        %1063 = vst.msk [vmem:[#allocation5 + $0x18] sm:$0xff] %vm503, %v1059
        %1064 = vst.msk [vmem:[#allocation3] sm:$0xff] %vm879, %v811
        %1065 = vst.msk [vmem:[#allocation3 + $0x8] sm:$0xff] %vm879, %v812
        %1066 = vst.msk [vmem:[#allocation3 + $0x10] sm:$0xff] %vm879, %v813
        %1067 = vst.msk [vmem:[#allocation3 + $0x18] sm:$0xff] %vm879, %v814
        // Predicated region
        $region41: #{tpu_custom_call.1} parent=35 // pred_check
          %p1068 = pneg %p403
        $region42: #{tpu_custom_call.1} parent=35 // pred_check_branch
          %1070 = sbr.rel (%p1068) target = $region44
        $region43: #{tpu_custom_call.1} parent=35 // pred_region
          %v1071 = vld [vmem:[#allocation4] sm:$0xff]
          %v1072 = vld [vmem:[#allocation4 + $0x8] sm:$0xff]
          %v1073 = vld [vmem:[#allocation4 + $0x10] sm:$0xff]
          %v1074 = vld [vmem:[#allocation4 + $0x18] sm:$0xff]
          %v1075 = vrcp.pop %v1071
          %v1076 = vmul.f32 %v1071, %v1075
          %v1077 = vsub.f32 1.0, %v1076
          %v1078 = vmul.f32 %v1075, %v1077
          %v1079 = vadd.f32 %v1075, %v1078
          %vm1080 = vweird.f32 %v1071
          %vm1081 = vweird.f32 %v1075
          %vm1082 = vmor %vm1080, %vm1081
          %v1083 = vsel %vm1082, %v1075, %v1079
          %v1084 = vand.u32 2147483647, %v1071
          %vm1085 = vcmp.eq.f32.partialorder %v1084, 8.507059e+37
          %v1086 = vand.u32 %v1071, 2147483648
          %v1087 = vor.u32 1.1754944e-38, %v1086
          %v1088 = vsel %vm1085, %v1087, %v1083
          %v1089 = vrcp.pop %v1072
          %v1090 = vmul.f32 %v1072, %v1089
          %v1091 = vsub.f32 1.0, %v1090
          %v1092 = vmul.f32 %v1089, %v1091
          %v1093 = vadd.f32 %v1089, %v1092
          %vm1094 = vweird.f32 %v1072
          %vm1095 = vweird.f32 %v1089
          %vm1096 = vmor %vm1094, %vm1095
          %v1097 = vsel %vm1096, %v1089, %v1093
          %v1098 = vand.u32 2147483647, %v1072
          %vm1099 = vcmp.eq.f32.partialorder %v1098, 8.507059e+37
          %v1100 = vand.u32 %v1072, 2147483648
          %v1101 = vor.u32 1.1754944e-38, %v1100
          %v1102 = vsel %vm1099, %v1101, %v1097
          %v1103 = vrcp.pop %v1073
          %v1104 = vmul.f32 %v1073, %v1103
          %v1105 = vsub.f32 1.0, %v1104
          %v1106 = vmul.f32 %v1103, %v1105
          %v1107 = vadd.f32 %v1103, %v1106
          %vm1108 = vweird.f32 %v1073
          %vm1109 = vweird.f32 %v1103
          %vm1110 = vmor %vm1108, %vm1109
          %v1111 = vsel %vm1110, %v1103, %v1107
          %v1112 = vand.u32 2147483647, %v1073
          %vm1113 = vcmp.eq.f32.partialorder %v1112, 8.507059e+37
          %v1114 = vand.u32 %v1073, 2147483648
          %v1115 = vor.u32 1.1754944e-38, %v1114
          %v1116 = vsel %vm1113, %v1115, %v1111
          %v1117 = vrcp.pop %v1074
          %v1118 = vmul.f32 %v1074, %v1117
          %v1119 = vsub.f32 1.0, %v1118
          %v1120 = vmul.f32 %v1117, %v1119
          %v1121 = vadd.f32 %v1117, %v1120
          %vm1122 = vweird.f32 %v1074
          %vm1123 = vweird.f32 %v1117
          %vm1124 = vmor %vm1122, %vm1123
          %v1125 = vsel %vm1124, %v1117, %v1121
          %v1126 = vand.u32 2147483647, %v1074
          %vm1127 = vcmp.eq.f32.partialorder %v1126, 8.507059e+37
          %v1128 = vand.u32 %v1074, 2147483648
          %v1129 = vor.u32 1.1754944e-38, %v1128
          %v1130 = vsel %vm1127, %v1129, %v1125
          %v1131 = vld [vmem:[#allocation5] sm:$0xff]
          %v1132 = vld [vmem:[#allocation5 + $0x8] sm:$0xff]
          %v1133 = vld [vmem:[#allocation5 + $0x10] sm:$0xff]
          %v1134 = vld [vmem:[#allocation5 + $0x18] sm:$0xff]
          %1136 = vset.pattern.permute.xlu0 0
          %1137 = vperm.xlu0 %1136, %v1088
          %v1138 = vpop.permute.xlu0 %1137
          %1141 = vset.pattern.permute.xlu0 0
          %1142 = vperm.xlu0 %1141, %v1102
          %v1143 = vpop.permute.xlu0 %1142
          %1146 = vset.pattern.permute.xlu0 0
          %1147 = vperm.xlu0 %1146, %v1116
          %v1148 = vpop.permute.xlu0 %1147
          %1151 = vset.pattern.permute.xlu0 0
          %1152 = vperm.xlu0 %1151, %v1130
          %v1153 = vpop.permute.xlu0 %1152
          %v1155 = vmul.f32 %v1131, %v1138
          %v1156 = vmul.f32 %v1132, %v1143
          %v1157 = vmul.f32 %v1133, %v1148
          %v1158 = vmul.f32 %v1134, %v1153
          %1159 = vst.msk [vmem:[%s346] sm:$0xff] %vm503, %v1155
          %1160 = vst.msk [vmem:[%s346 + $0x8] sm:$0xff] %vm503, %v1156
          %1161 = vst.msk [vmem:[%s346 + $0x10] sm:$0xff] %vm503, %v1157
          %1162 = vst.msk [vmem:[%s346 + $0x18] sm:$0xff] %vm503, %v1158
        $region44: #{tpu_custom_call.1} parent=35 // pred_fallthru
          _
        %s1163 = sand.u32 %s176, 1
        %s1164 = scalar_lea.sflag [#allocation7], %s1163
        %s1165 = sand.u32 %s176, 1
        %s1166 = smul.addr %s1165, 32
        %s1167 = scalar_lea.vmem [#allocation6], %s1166
        // Predicated region
        $region45: #{tpu_custom_call.1} parent=35 // pred_check
          %p1168 = pneg %p186
        $region46: #{tpu_custom_call.1} parent=35 // pred_check_branch
          %1170 = sbr.rel (%p1168) target = $region48
        $region47: #{tpu_custom_call.1} parent=35 // pred_region
          %s1171 = smul.u32 4, %s25
          %1173 = vsyncadd %s1164, 0
          %s1174 = sadd.s32 %s26, %s1171
          %s1175 = smul.addr %s24, 4
          %s1176 = sadd.s32 %s1174, %s1175
          %s1177 = smul.addr %s1176, 8
          %s1178 = scalar_lea.hbm %s4, %s1177
          %s1179 = sshll.u32 %s1167, 4
          %s1180 = int_to_ptr.vmem [resolvable:$true] %s1179
          %s1181 = sshll.u32 %s1178, 4
          %s1182 = int_to_ptr.hbm [resolvable:$true] %s1181
          %1187 = dma.vmem_to_hbm [thread:$0]  %s1180, 512, %s1182, %s1164, 128, 128, 8
        $region48: #{tpu_custom_call.1} parent=35 // pred_fallthru
          _
      $region36: #{tpu_custom_call.1} parent=5 // pred_fallthru
        _
      %p1188 = scmp.le.s32.totalorder 2, %s13
      // Predicated region
      $region49: #{tpu_custom_call.1} parent=5 // pred_check
        %p1189 = pneg %p1188
      $region50: #{tpu_custom_call.1} parent=5 // pred_check_branch
        %1191 = sbr.rel (%p1189) target = $region52
      $region51: #{tpu_custom_call.1} parent=5 // pred_region
        %s1192 = ssub.s32 %s13, 2
        // Predicated region
        $region53: #{tpu_custom_call.1} parent=51 // pred_check
          %p1193 = pneg %p192
        $region54: #{tpu_custom_call.1} parent=51 // pred_check_branch
          %1195 = sbr.rel (%p1193) target = $region56
        $region55: #{tpu_custom_call.1} parent=51 // pred_region
          %s1196 = sand.u32 %s177, 1
          %s1197 = scalar_lea.sflag [#allocation7], %s1196
          %s1198 = sand.u32 %s177, 1
          %s1199 = smul.addr %s1198, 32
          %s1200 = scalar_lea.vmem [#allocation6], %s1199
          %1202 = dma.done %s1197, 512
        $region56: #{tpu_custom_call.1} parent=51 // pred_fallthru
          _
      $region52: #{tpu_custom_call.1} parent=5 // pred_fallthru
        _
    $region6: #{tpu_custom_call.1} parent=1 // loop_footer
      %s17 = sadd.s32 1, %s13
    $region7: #{tpu_custom_call.1} parent=1 // loop_footer_branch
      %12 = sbr.rel target = $region3
    $region8: #{tpu_custom_call.1} parent=1 // loop_exit
      _
    %1203 = vsyncpa [#allocation7], 1
    %s1204 = scalar_lea.sflag [#allocation7], 1
    %1205 = vsyncpa %s1204, 1

</llo_original>
